<compile_context>
chip_gen: v5e
topology: v5e:2x2
jax: 0.10.0
libtpu: 0.0.40
codegen_flags: <defaults>
</compile_context>

<pallas_src>
import jax
import jax.numpy as jnp
from jax.experimental import pallas as pl
from jax.experimental.pallas import tpu as pltpu

_SUBLANE = 8


def _round_up(x, m):
    return ((x + m - 1) // m) * m


def _leaky_relu(x, slope=0.01):
    return jnp.where(x >= 0, x, slope * x)


def _make_kernel(lasland, compute_dtype):
    """Kernel closure over the static feature split and matmul operand dtype."""
    LAS = lasland
    cd = compute_dtype

    def kernel(
        x_ref,                # [TN, firland]  f32  (cast to cd in-register)
        eps_ref,              # [TN, lasland]  f32  (randn_like(std) equiv.)
        w_e0_ref, b_e0_ref,   # (firland, midland) cd, (1, midland) f32
        w_e1_ref, b_e1_ref,   # (midland, lasland) cd, (1, lasland) f32
        w_d0_ref, b_d0_ref,   # (lasland, midland) cd, (1, midland) f32
        w_d1_ref, b_d1_ref,   # (midland, firland) cd, (1, firland) f32
        out_ref,              # [TN, 2*lasland + firland]  fused output slab
    ):
        # encode0 + leaky_relu   (bf16 operands, f32 MXU accumulation)
        x = x_ref[...].astype(cd)
        embedding = _leaky_relu(
            jnp.dot(x, w_e0_ref[...], preferred_element_type=jnp.float32)
            + b_e0_ref[...])

        # encode1 (reference applies it twice to the same embedding -> mu == logvar)
        mu = jnp.dot(embedding.astype(cd), w_e1_ref[...],
                     preferred_element_type=jnp.float32) + b_e1_ref[...]

        # reparameterize: eps * exp(0.5 * logvar) + mu
        std = jnp.exp(0.5 * mu)
        emb_out = eps_ref[...] * std + mu

        # decode0 + leaky_relu
        d0 = _leaky_relu(
            jnp.dot(emb_out.astype(cd), w_d0_ref[...],
                    preferred_element_type=jnp.float32) + b_d0_ref[...])

        # decode1 + sigmoid
        res = jax.nn.sigmoid(
            jnp.dot(d0.astype(cd), w_d1_ref[...],
                    preferred_element_type=jnp.float32) + b_d1_ref[...])

        # Fused writeback: single (TN, 2*lasland+firland) slab, one DMA/step.
        out_ref[:, :LAS] = mu.astype(out_ref.dtype)
        out_ref[:, LAS:2 * LAS] = emb_out.astype(out_ref.dtype)
        out_ref[:, 2 * LAS:] = res.astype(out_ref.dtype)

    return kernel


def _choose_tile_n(n, tile_n, row_vmem_bytes, vmem_budget=24 * 1024 * 1024):
    """Pick a batch tile: large (amortize per-step overhead), VMEM-safe, and
    split so v7x's two TensorCores both get grid steps."""
    tn = min(tile_n, _round_up(n, _SUBLANE))
    cap = max(_SUBLANE, (vmem_budget // max(row_vmem_bytes, 1))
              // _SUBLANE * _SUBLANE)
    tn = min(tn, cap)
    steps = -(-n // tn)
    if steps == 1 and n >= 2 * _SUBLANE:
        # Single-step grid would leave one v7x TensorCore idle: split in two.
        tn = _round_up(-(-n // 2), _SUBLANE)
    elif steps > 1 and steps % 2 == 1:
        # Prefer an even step count for clean megacore sharding.
        tn = max(_SUBLANE, _round_up(-(-n // (steps + 1)), _SUBLANE))
    return tn


def ph_autoencoder(features, params, eps, *, tile_n=4096,
                   compute_dtype=jnp.bfloat16, out_dtype=jnp.float32):
    """features: [N, firland] f32.  params: (in,out) weights, (1,out) biases.
    eps: [N, lasland] f32 standard-normal draw.
    Returns (mu, logvar, embedding_out, embedding_res) like the torch module
    (logvar is the same array as mu — encode1 is applied twice to the same
    embedding in the reference, so they are identical by construction)."""
    n, firland = features.shape
    midland = params["w_e0"].shape[1]
    lasland = params["w_e1"].shape[1]
    out_w = 2 * lasland + firland

    cd = compute_dtype
    cd_bytes = jnp.dtype(cd).itemsize
    out_bytes = jnp.dtype(out_dtype).itemsize

    # Per-row VMEM: double-buffered batch tiles (x f32, eps f32, fused output)
    # plus the f32 intermediates live in the body.  Budget fits v5e's 16 MiB
    # default scoped VMEM and v7x's 32 MiB scoped / 64 MiB physical.
    row_vmem = 2 * (firland * 4 + lasland * 4 + out_w * out_bytes) \
        + (2 * midland + 2 * lasland + firland) * 4
    tn = _choose_tile_n(n, tile_n, row_vmem)
    grid = (pl.cdiv(n, tn),)

    # Weights cast once (tiny, ~20 KB total); x deliberately NOT pre-cast —
    # the kernel reads f32 straight from HBM and casts in-register.
    w_e0 = params["w_e0"].astype(cd)
    w_e1 = params["w_e1"].astype(cd)
    w_d0 = params["w_d0"].astype(cd)
    w_d1 = params["w_d1"].astype(cd)
    b_e0 = params["b_e0"].astype(jnp.float32)
    b_e1 = params["b_e1"].astype(jnp.float32)
    b_d0 = params["b_d0"].astype(jnp.float32)
    b_d1 = params["b_d1"].astype(jnp.float32)

    def batch_spec(feat):
        return pl.BlockSpec((tn, feat), lambda i: (i, 0))

    def resident_spec(shape):
        # Constant index_map -> fetched once, VMEM-resident across all steps.
        # NOTE: pl.Buffered(1) would trim the dead second buffer (~20 KB total
        # at these dims); omitted as negligible.
        return pl.BlockSpec(shape, lambda i: (0, 0))

    in_specs = [
        batch_spec(firland),                    # x (f32)
        batch_spec(lasland),                    # eps (f32)
        resident_spec((firland, midland)), resident_spec((1, midland)),
        resident_spec((midland, lasland)), resident_spec((1, lasland)),
        resident_spec((lasland, midland)), resident_spec((1, midland)),
        resident_spec((midland, firland)), resident_spec((1, firland)),
    ]
    out_specs = batch_spec(out_w)
    out_shape = jax.ShapeDtypeStruct((n, out_w), out_dtype)

    flops = 2 * n * (firland * midland + midland * lasland
                     + lasland * midland + midland * firland)
    transcendentals = n * (lasland + firland)          # exp + sigmoid
    bytes_accessed = (
        n * firland * 4 + n * lasland * 4                               # x, eps
        + 2 * (firland * midland + midland * lasland) * cd_bytes        # weights
        + (2 * midland + lasland + firland) * 4                         # biases
        + n * out_w * out_bytes                                         # fused out
    )

    out = pl.pallas_call(
        _make_kernel(lasland, cd),
        out_shape=out_shape,
        grid=grid,
        in_specs=in_specs,
        out_specs=out_specs,
        compiler_params=pltpu.CompilerParams(
            dimension_semantics=("parallel",),
            vmem_limit_bytes=32 * 1024 * 1024),
        cost_estimate=pl.CostEstimate(
            flops=flops, transcendentals=transcendentals,
            bytes_accessed=bytes_accessed),
    )(features, eps, w_e0, b_e0, w_e1, b_e1, w_d0, b_d0, w_d1, b_d1)

    mu = out[:, :lasland]
    emb_out = out[:, lasland:2 * lasland]
    res = out[:, 2 * lasland:]
    # logvar == mu by construction in the reference module (same buffer).
    return mu, mu, emb_out, res


def init_params(key, firland, midland, lasland):
    """Deterministic synthetic init (torch.nn.Linear-style). Weights (in, out)."""
    keys = jax.random.split(key, 8)

    def lin(kw, kb, fan_in, fan_out):
        bound = 1.0 / jnp.sqrt(fan_in)
        w = jax.random.uniform(kw, (fan_in, fan_out), jnp.float32, -bound, bound)
        b = jax.random.uniform(kb, (1, fan_out), jnp.float32, -bound, bound)
        return w, b

    w_e0, b_e0 = lin(keys[0], keys[1], firland, midland)
    w_e1, b_e1 = lin(keys[2], keys[3], midland, lasland)
    w_d0, b_d0 = lin(keys[4], keys[5], lasland, midland)
    w_d1, b_d1 = lin(keys[6], keys[7], midland, firland)
    return {
        "w_e0": w_e0, "b_e0": b_e0,
        "w_e1": w_e1, "b_e1": b_e1,
        "w_d0": w_d0, "b_d0": b_d0,
        "w_d1": w_d1, "b_d1": b_d1,
    }


def reference_forward(features, params, eps, compute_dtype=jnp.bfloat16):
    """Plain-JAX reference mirroring the PyTorch module (same bf16 matmul
    operands / f32 accumulation recipe as the kernel)."""
    cd = compute_dtype

    def mm(a, w):
        return jnp.dot(a.astype(cd), w.astype(cd),
                       preferred_element_type=jnp.float32)

    emb = jax.nn.leaky_relu(mm(features, params["w_e0"]) + params["b_e0"], 0.01)
    mu = mm(emb, params["w_e1"]) + params["b_e1"]
    logvar = mu                                   # encode1 applied twice
    std = jnp.exp(0.5 * logvar)
    emb_out = eps * std + mu
    d0 = jax.nn.leaky_relu(mm(emb_out, params["w_d0"]) + params["b_d0"], 0.01)
    res = jax.nn.sigmoid(mm(d0, params["w_d1"]) + params["b_d1"])
    return mu, logvar, emb_out, res


if __name__ == "__main__":
    # Small shapes: batch=8, firland=64, midland=32, lasland=16.
    N, FIRLAND, MIDLAND, LASLAND = 8, 64, 32, 16

    key = jax.random.PRNGKey(0)
    k_x, k_eps, k_params = jax.random.split(key, 3)

    features = jax.random.normal(k_x, (N, FIRLAND), jnp.float32)
    eps = jax.random.normal(k_eps, (N, LASLAND), jnp.float32)  # randn_like(std)
    params = init_params(k_params, FIRLAND, MIDLAND, LASLAND)

    mu, logvar, emb_out, res = jax.block_until_ready(
        ph_autoencoder(features, params, eps)
    )

    # correctness check against plain-JAX reference (same bf16/f32 recipe)
    mu_r, logvar_r, emb_out_r, res_r = reference_forward(features, params, eps)
    assert jnp.allclose(mu, mu_r, atol=1e-3, rtol=1e-3)
    assert jnp.allclose(logvar, logvar_r, atol=1e-3, rtol=1e-3)
    assert jnp.allclose(emb_out, emb_out_r, atol=1e-3, rtol=1e-3)
    assert jnp.allclose(res, res_r, atol=1e-3, rtol=1e-3)

    print("KERNEL_OK")
</pallas_src>

<mosaic_0001>
module attributes {stable_mosaic.version = 11 : i64} {
  func.func @kernel(%arg0: i32, %arg1: memref<8x64xf32, #tpu.memory_space<vmem>>, %arg2: memref<8x16xf32, #tpu.memory_space<vmem>>, %arg3: memref<64x32xbf16, #tpu.memory_space<vmem>>, %arg4: memref<1x32xf32, #tpu.memory_space<vmem>>, %arg5: memref<32x16xbf16, #tpu.memory_space<vmem>>, %arg6: memref<1x16xf32, #tpu.memory_space<vmem>>, %arg7: memref<16x32xbf16, #tpu.memory_space<vmem>>, %arg8: memref<1x32xf32, #tpu.memory_space<vmem>>, %arg9: memref<32x64xbf16, #tpu.memory_space<vmem>>, %arg10: memref<1x64xf32, #tpu.memory_space<vmem>>, %arg11: memref<8x96xf32, #tpu.memory_space<vmem>>) attributes {dimension_semantics = [#tpu.dimension_semantics<parallel>], iteration_bounds = array<i64: 1>, scalar_prefetch = 0 : i64, scratch_operands = 0 : i64, tpu.core_type = #tpu.core_type<tc>, window_params = [{transform_indices = @transform_0, window_bounds = array<i64: 8, 64>}, {transform_indices = @transform_1, window_bounds = array<i64: 8, 16>}, {pipeline_mode = #tpu.pipeline_mode<synchronous>, transform_indices = @transform_2, window_bounds = array<i64: 64, 32>}, {pipeline_mode = #tpu.pipeline_mode<synchronous>, transform_indices = @transform_3, window_bounds = array<i64: 1, 32>}, {pipeline_mode = #tpu.pipeline_mode<synchronous>, transform_indices = @transform_4, window_bounds = array<i64: 32, 16>}, {pipeline_mode = #tpu.pipeline_mode<synchronous>, transform_indices = @transform_5, window_bounds = array<i64: 1, 16>}, {pipeline_mode = #tpu.pipeline_mode<synchronous>, transform_indices = @transform_6, window_bounds = array<i64: 16, 32>}, {pipeline_mode = #tpu.pipeline_mode<synchronous>, transform_indices = @transform_7, window_bounds = array<i64: 1, 32>}, {pipeline_mode = #tpu.pipeline_mode<synchronous>, transform_indices = @transform_8, window_bounds = array<i64: 32, 64>}, {pipeline_mode = #tpu.pipeline_mode<synchronous>, transform_indices = @transform_9, window_bounds = array<i64: 1, 64>}, {transform_indices = @transform_10, window_bounds = array<i64: 8, 96>}]} {
    %c0 = arith.constant 0 : index
    %c0_0 = arith.constant 0 : index
    %0 = vector.load %arg1[%c0, %c0_0] : memref<8x64xf32, #tpu.memory_space<vmem>>, vector<8x64xf32>
    %1 = arith.truncf %0 : vector<8x64xf32> to vector<8x64xbf16>
    %c0_1 = arith.constant 0 : index
    %c0_2 = arith.constant 0 : index
    %2 = vector.load %arg3[%c0_1, %c0_2] : memref<64x32xbf16, #tpu.memory_space<vmem>>, vector<64x32xbf16>
    %cst = arith.constant dense<0.000000e+00> : vector<8x32xf32>
    %3 = tpu.matmul %1, %2, %cst {dimension_numbers = #tpu.dot_dimension_numbers<[1], [0], [0], [1], [0, 0, 1, 1], [], []>} : vector<8x64xbf16>, vector<64x32xbf16>, vector<8x32xf32> -> vector<8x32xf32>
    %c0_3 = arith.constant 0 : index
    %c0_4 = arith.constant 0 : index
    %4 = vector.load %arg4[%c0_3, %c0_4] : memref<1x32xf32, #tpu.memory_space<vmem>>, vector<1x32xf32>
    %5 = vector.broadcast %4 : vector<1x32xf32> to vector<8x32xf32>
    %6 = arith.addf %3, %5 : vector<8x32xf32>
    %cst_5 = arith.constant 0.000000e+00 : f32
    %7 = vector.broadcast %cst_5 : f32 to vector<8x32xf32>
    %8 = arith.cmpf oge, %6, %7 : vector<8x32xf32>
    %cst_6 = arith.constant 0.00999999977 : f32
    %9 = vector.broadcast %cst_6 : f32 to vector<8x32xf32>
    %10 = arith.mulf %9, %6 : vector<8x32xf32>
    %11 = arith.select %8, %6, %10 : vector<8x32xi1>, vector<8x32xf32>
    %12 = arith.truncf %11 : vector<8x32xf32> to vector<8x32xbf16>
    %c0_7 = arith.constant 0 : index
    %c0_8 = arith.constant 0 : index
    %13 = vector.load %arg5[%c0_7, %c0_8] : memref<32x16xbf16, #tpu.memory_space<vmem>>, vector<32x16xbf16>
    %cst_9 = arith.constant dense<0.000000e+00> : vector<8x16xf32>
    %14 = tpu.matmul %12, %13, %cst_9 {dimension_numbers = #tpu.dot_dimension_numbers<[1], [0], [0], [1], [0, 0, 1, 1], [], []>} : vector<8x32xbf16>, vector<32x16xbf16>, vector<8x16xf32> -> vector<8x16xf32>
    %c0_10 = arith.constant 0 : index
    %c0_11 = arith.constant 0 : index
    %15 = vector.load %arg6[%c0_10, %c0_11] : memref<1x16xf32, #tpu.memory_space<vmem>>, vector<1x16xf32>
    %16 = vector.broadcast %15 : vector<1x16xf32> to vector<8x16xf32>
    %17 = arith.addf %14, %16 : vector<8x16xf32>
    %cst_12 = arith.constant 5.000000e-01 : f32
    %18 = vector.broadcast %cst_12 : f32 to vector<8x16xf32>
    %19 = arith.mulf %18, %17 : vector<8x16xf32>
    %20 = math.exp %19 : vector<8x16xf32>
    %c0_13 = arith.constant 0 : index
    %c0_14 = arith.constant 0 : index
    %21 = vector.load %arg2[%c0_13, %c0_14] : memref<8x16xf32, #tpu.memory_space<vmem>>, vector<8x16xf32>
    %22 = arith.mulf %21, %20 : vector<8x16xf32>
    %23 = arith.addf %22, %17 : vector<8x16xf32>
    %24 = arith.truncf %23 : vector<8x16xf32> to vector<8x16xbf16>
    %c0_15 = arith.constant 0 : index
    %c0_16 = arith.constant 0 : index
    %25 = vector.load %arg7[%c0_15, %c0_16] : memref<16x32xbf16, #tpu.memory_space<vmem>>, vector<16x32xbf16>
    %cst_17 = arith.constant dense<0.000000e+00> : vector<8x32xf32>
    %26 = tpu.matmul %24, %25, %cst_17 {dimension_numbers = #tpu.dot_dimension_numbers<[1], [0], [0], [1], [0, 0, 1, 1], [], []>} : vector<8x16xbf16>, vector<16x32xbf16>, vector<8x32xf32> -> vector<8x32xf32>
    %c0_18 = arith.constant 0 : index
    %c0_19 = arith.constant 0 : index
    %27 = vector.load %arg8[%c0_18, %c0_19] : memref<1x32xf32, #tpu.memory_space<vmem>>, vector<1x32xf32>
    %28 = vector.broadcast %27 : vector<1x32xf32> to vector<8x32xf32>
    %29 = arith.addf %26, %28 : vector<8x32xf32>
    %cst_20 = arith.constant 0.000000e+00 : f32
    %30 = vector.broadcast %cst_20 : f32 to vector<8x32xf32>
    %31 = arith.cmpf oge, %29, %30 : vector<8x32xf32>
    %cst_21 = arith.constant 0.00999999977 : f32
    %32 = vector.broadcast %cst_21 : f32 to vector<8x32xf32>
    %33 = arith.mulf %32, %29 : vector<8x32xf32>
    %34 = arith.select %31, %29, %33 : vector<8x32xi1>, vector<8x32xf32>
    %35 = arith.truncf %34 : vector<8x32xf32> to vector<8x32xbf16>
    %c0_22 = arith.constant 0 : index
    %c0_23 = arith.constant 0 : index
    %36 = vector.load %arg9[%c0_22, %c0_23] : memref<32x64xbf16, #tpu.memory_space<vmem>>, vector<32x64xbf16>
    %cst_24 = arith.constant dense<0.000000e+00> : vector<8x64xf32>
    %37 = tpu.matmul %35, %36, %cst_24 {dimension_numbers = #tpu.dot_dimension_numbers<[1], [0], [0], [1], [0, 0, 1, 1], [], []>} : vector<8x32xbf16>, vector<32x64xbf16>, vector<8x64xf32> -> vector<8x64xf32>
    %c0_25 = arith.constant 0 : index
    %c0_26 = arith.constant 0 : index
    %38 = vector.load %arg10[%c0_25, %c0_26] : memref<1x64xf32, #tpu.memory_space<vmem>>, vector<1x64xf32>
    %39 = vector.broadcast %38 : vector<1x64xf32> to vector<8x64xf32>
    %40 = arith.addf %37, %39 : vector<8x64xf32>
    %41 = arith.negf %40 : vector<8x64xf32>
    %42 = math.exp %41 : vector<8x64xf32>
    %cst_27 = arith.constant 1.000000e+00 : f32
    %43 = vector.broadcast %cst_27 : f32 to vector<8x64xf32>
    %44 = arith.addf %43, %42 : vector<8x64xf32>
    %45 = arith.divf %43, %44 : vector<8x64xf32>
    %c0_28 = arith.constant 0 : index
    %c0_29 = arith.constant 0 : index
    %46 = vector.load %arg11[%c0_28, %c0_29] : memref<8x96xf32, #tpu.memory_space<vmem>>, vector<8x16xf32>
    tpu.vector_store %arg11[%c0_28, %c0_29], %17 {strides = array<i32>} : memref<8x96xf32, #tpu.memory_space<vmem>>, vector<8x16xf32>,
    %c0_30 = arith.constant 0 : index
    %c16 = arith.constant 16 : index
    %47 = vector.load %arg11[%c0_30, %c16] : memref<8x96xf32, #tpu.memory_space<vmem>>, vector<8x16xf32>
    tpu.vector_store %arg11[%c0_30, %c16], %23 {strides = array<i32>} : memref<8x96xf32, #tpu.memory_space<vmem>>, vector<8x16xf32>,
    %c0_31 = arith.constant 0 : index
    %c32 = arith.constant 32 : index
    %48 = vector.load %arg11[%c0_31, %c32] : memref<8x96xf32, #tpu.memory_space<vmem>>, vector<8x64xf32>
    tpu.vector_store %arg11[%c0_31, %c32], %45 {strides = array<i32>} : memref<8x96xf32, #tpu.memory_space<vmem>>, vector<8x64xf32>,
    return
  }
  func.func @transform_0(%arg0: i32) -> (i32, i32) {
    %c0_i32 = arith.constant 0 : i32
    %c0_i32_0 = arith.constant 0 : i32
    return %arg0, %c0_i32 : i32, i32
  }
  func.func @transform_1(%arg0: i32) -> (i32, i32) {
    %c0_i32 = arith.constant 0 : i32
    %c0_i32_0 = arith.constant 0 : i32
    return %arg0, %c0_i32 : i32, i32
  }
  func.func @transform_2(%arg0: i32) -> (i32, i32) {
    %c0_i32 = arith.constant 0 : i32
    %c0_i32_0 = arith.constant 0 : i32
    %c0_i32_1 = arith.constant 0 : i32
    return %c0_i32, %c0_i32_0 : i32, i32
  }
  func.func @transform_3(%arg0: i32) -> (i32, i32) {
    %c0_i32 = arith.constant 0 : i32
    %c0_i32_0 = arith.constant 0 : i32
    %c0_i32_1 = arith.constant 0 : i32
    return %c0_i32, %c0_i32_0 : i32, i32
  }
  func.func @transform_4(%arg0: i32) -> (i32, i32) {
    %c0_i32 = arith.constant 0 : i32
    %c0_i32_0 = arith.constant 0 : i32
    %c0_i32_1 = arith.constant 0 : i32
    return %c0_i32, %c0_i32_0 : i32, i32
  }
  func.func @transform_5(%arg0: i32) -> (i32, i32) {
    %c0_i32 = arith.constant 0 : i32
    %c0_i32_0 = arith.constant 0 : i32
    %c0_i32_1 = arith.constant 0 : i32
    return %c0_i32, %c0_i32_0 : i32, i32
  }
  func.func @transform_6(%arg0: i32) -> (i32, i32) {
    %c0_i32 = arith.constant 0 : i32
    %c0_i32_0 = arith.constant 0 : i32
    %c0_i32_1 = arith.constant 0 : i32
    return %c0_i32, %c0_i32_0 : i32, i32
  }
  func.func @transform_7(%arg0: i32) -> (i32, i32) {
    %c0_i32 = arith.constant 0 : i32
    %c0_i32_0 = arith.constant 0 : i32
    %c0_i32_1 = arith.constant 0 : i32
    return %c0_i32, %c0_i32_0 : i32, i32
  }
  func.func @transform_8(%arg0: i32) -> (i32, i32) {
    %c0_i32 = arith.constant 0 : i32
    %c0_i32_0 = arith.constant 0 : i32
    %c0_i32_1 = arith.constant 0 : i32
    return %c0_i32, %c0_i32_0 : i32, i32
  }
  func.func @transform_9(%arg0: i32) -> (i32, i32) {
    %c0_i32 = arith.constant 0 : i32
    %c0_i32_0 = arith.constant 0 : i32
    %c0_i32_1 = arith.constant 0 : i32
    return %c0_i32, %c0_i32_0 : i32, i32
  }
  func.func @transform_10(%arg0: i32) -> (i32, i32) {
    %c0_i32 = arith.constant 0 : i32
    %c0_i32_0 = arith.constant 0 : i32
    return %arg0, %c0_i32 : i32, i32
  }
}

</mosaic_0001>

<llo_original>
// kernel: tpu_custom_call.1
$region0: #{tpu_custom_call.1}
  #allocation0 [shape = 'u32[]', space=smem, size = 0x4, offset = 0x4, fixed_abs, tag = 'smem constant byte address 0x4 - core index']
  #allocation1 [shape = 'u32[72,128]{1,0:T(1,128)}', space=vmem, size = 0x9000, scoped, tag = 'internal scratch']
  %s0 = inlined_call_operand.vmem [shape: f32[8,64], index: 0, kind: input, shape index: {}]
  %s1 = inlined_call_operand.vmem [shape: f32[8,16], index: 1, kind: input, shape index: {}]
  %s2 = inlined_call_operand.vmem [shape: bf16[64,32], index: 2, kind: input, shape index: {}]
  %s3 = inlined_call_operand.vmem [shape: f32[1,32], index: 3, kind: input, shape index: {}]
  %s4 = inlined_call_operand.vmem [shape: bf16[32,16], index: 4, kind: input, shape index: {}]
  %s5 = inlined_call_operand.vmem [shape: f32[1,16], index: 5, kind: input, shape index: {}]
  %s6 = inlined_call_operand.vmem [shape: bf16[16,32], index: 6, kind: input, shape index: {}]
  %s7 = inlined_call_operand.vmem [shape: f32[1,32], index: 7, kind: input, shape index: {}]
  %s8 = inlined_call_operand.vmem [shape: bf16[32,64], index: 8, kind: input, shape index: {}]
  %s9 = inlined_call_operand.vmem [shape: f32[1,64], index: 9, kind: input, shape index: {}]
  %s10 = inlined_call_operand.hbm [shape: f32[8,96], index: 10, kind: output, shape index: {}]
  %s11 = sld [smem:[#allocation0]]
  $region50: #{tpu_custom_call.1} parent=0
    _
  %s13 = ssub.s32 1, %s11
  %s14 = scalar_select 0, %s13, %s11
  $region1: #{tpu_custom_call.1} parent=0
    #allocation2 [shape = 'u8[4096]{0}', space=vmem, size = 0x1000, scoped, tag = 'output window, operand 0, single buffered']
    #allocation3 [shape = 's32[1]{0}', space=sflag, size = 0x4, scoped, tag = 'scoped memory for tpu_custom_call.1']
    %15 = vsyncpa [#allocation3], 0
    // Predicated region
    $region2: #{tpu_custom_call.1} parent=1 // pred_check
      _
    $region3: #{tpu_custom_call.1} parent=1 // pred_check_branch
      %17 = sbr.rel (0) target = $region5
    $region4: #{tpu_custom_call.1} parent=1 // pred_region
      _
    $region5: #{tpu_custom_call.1} parent=1 // pred_fallthru
      _
    // Predicated region
    $region6: #{tpu_custom_call.1} parent=1 // pred_check
      _
    $region7: #{tpu_custom_call.1} parent=1 // pred_check_branch
      %19 = sbr.rel (0) target = $region9
    $region8: #{tpu_custom_call.1} parent=1 // pred_region
      _
    $region9: #{tpu_custom_call.1} parent=1 // pred_fallthru
      _
    // Predicated region
    $region10: #{tpu_custom_call.1} parent=1 // pred_check
      _
    $region11: #{tpu_custom_call.1} parent=1 // pred_check_branch
      %21 = sbr.rel (0) target = $region13
    $region12: #{tpu_custom_call.1} parent=1 // pred_region
      _
    $region13: #{tpu_custom_call.1} parent=1 // pred_fallthru
      _
    // Predicated region
    $region14: #{tpu_custom_call.1} parent=1 // pred_check
      _
    $region15: #{tpu_custom_call.1} parent=1 // pred_check_branch
      %23 = sbr.rel (0) target = $region17
    $region16: #{tpu_custom_call.1} parent=1 // pred_region
      _
    $region17: #{tpu_custom_call.1} parent=1 // pred_fallthru
      _
    // Predicated region
    $region18: #{tpu_custom_call.1} parent=1 // pred_check
      _
    $region19: #{tpu_custom_call.1} parent=1 // pred_check_branch
      %25 = sbr.rel (0) target = $region21
    $region20: #{tpu_custom_call.1} parent=1 // pred_region
      _
    $region21: #{tpu_custom_call.1} parent=1 // pred_fallthru
      _
    // Predicated region
    $region22: #{tpu_custom_call.1} parent=1 // pred_check
      _
    $region23: #{tpu_custom_call.1} parent=1 // pred_check_branch
      %27 = sbr.rel (0) target = $region25
    $region24: #{tpu_custom_call.1} parent=1 // pred_region
      _
    $region25: #{tpu_custom_call.1} parent=1 // pred_fallthru
      _
    // Predicated region
    $region26: #{tpu_custom_call.1} parent=1 // pred_check
      _
    $region27: #{tpu_custom_call.1} parent=1 // pred_check_branch
      %29 = sbr.rel (0) target = $region29
    $region28: #{tpu_custom_call.1} parent=1 // pred_region
      _
    $region29: #{tpu_custom_call.1} parent=1 // pred_fallthru
      _
    // Predicated region
    $region30: #{tpu_custom_call.1} parent=1 // pred_check
      _
    $region31: #{tpu_custom_call.1} parent=1 // pred_check_branch
      %31 = sbr.rel (0) target = $region33
    $region32: #{tpu_custom_call.1} parent=1 // pred_region
      _
    $region33: #{tpu_custom_call.1} parent=1 // pred_fallthru
      _
    // Predicated region
    $region34: #{tpu_custom_call.1} parent=1 // pred_check
      _
    $region35: #{tpu_custom_call.1} parent=1 // pred_check_branch
      %33 = sbr.rel (0) target = $region37
    $region36: #{tpu_custom_call.1} parent=1 // pred_region
      _
    $region37: #{tpu_custom_call.1} parent=1 // pred_fallthru
      _
    // Predicated region
    $region38: #{tpu_custom_call.1} parent=1 // pred_check
      _
    $region39: #{tpu_custom_call.1} parent=1 // pred_check_branch
      %35 = sbr.rel (0) target = $region41
    $region40: #{tpu_custom_call.1} parent=1 // pred_region
      _
    $region41: #{tpu_custom_call.1} parent=1 // pred_fallthru
      _
    %v37 = vld [vmem:[%s0] sm:$0xff]
    %v38 = vpack.c.bf16 %v37, %v37
    %v39 = vld [vmem:[%s2] sm:$0xf]
    %v40 = vld [vmem:[%s2 + $0x4] sm:$0xf]
    %v41 = vld [vmem:[%s2 + $0x8] sm:$0xf]
    %v42 = vld [vmem:[%s2 + $0xc] sm:$0xf]
    %v43 = vld [vmem:[%s2 + $0x10] sm:$0xf]
    %v44 = vld [vmem:[%s2 + $0x14] sm:$0xf]
    %v45 = vld [vmem:[%s2 + $0x18] sm:$0xf]
    %v46 = vld [vmem:[%s2 + $0x1c] sm:$0xf]
    %v47 = vld [vmem:[%s3] sm:$0x1]
    %v49 = vperm.slane %v47, 0
    %v59 = vunpack.c.l.b16 %v39
    %v60 = vunpack.c.l.b16 %v40
    %v61 = vunpack.c.l.b16 %v41
    %v62 = vunpack.c.l.b16 %v42
    %v63 = vunpack.c.l.b16 %v43
    %v64 = vunpack.c.l.b16 %v44
    %v65 = vunpack.c.l.b16 %v45
    %v66 = vunpack.c.l.b16 %v46
    %v67 = vpack.c.b16 %v60, %v59
    %v68 = vpack.c.b16 %v62, %v61
    %v69 = vpack.c.b16 %v64, %v63
    %v70 = vpack.c.b16 %v66, %v65
    %vm75 = vcmask 523264
    %v77 = vsel %vm75, %v38, 0
    %79 = vmatpush.bf16.msra.mxu0 0
    %80 = vmatpush.bf16.msra.mxu0 0
    %81 = vmatpush.bf16.msra.mxu0 0
    %82 = vmatpush.bf16.msra.mxu0 0
    %83 = vmatpush.bf16.msra.mxu0 %v70
    %84 = vmatpush.bf16.msra.mxu0 %v69
    %85 = vmatpush.bf16.msra.mxu0 %v68
    %86 = vmatpush.bf16.msra.mxu0 %v67
    %87 = vmatmul.bf16.gmra.mxu0 %v77
    %v88 = vpop.f32.mrf.mxu0
    %v89 = vadd.f32 %v49, %v88
    %v90 = vpop.f32.mrf.mxu0
    %91 = vdwg.mxu0
    %vm92 = vcmp.ge.f32.partialorder %v89, 0.0
    %v93 = vmul.f32 %v89, 0.01
    %v94 = vsel %vm92, %v89, %v93
    %v95 = vpack.c.bf16 %v94, %v94
    %v96 = vld [vmem:[%s4] sm:$0xf]
    %v97 = vld [vmem:[%s4 + $0x4] sm:$0xf]
    %v98 = vld [vmem:[%s4 + $0x8] sm:$0xf]
    %v99 = vld [vmem:[%s4 + $0xc] sm:$0xf]
    %v100 = vld [vmem:[%s5] sm:$0x1]
    %v102 = vperm.slane %v100, 0
    %v108 = vunpack.c.l.b16 %v96
    %v109 = vunpack.c.l.b16 %v97
    %v110 = vunpack.c.l.b16 %v98
    %v111 = vunpack.c.l.b16 %v99
    %v112 = vpack.c.b16 %v109, %v108
    %v113 = vpack.c.b16 %v111, %v110
    %vm116 = vcmask 261120
    %v118 = vsel %vm116, %v95, 0
    %120 = vmatpush.bf16.msra.mxu0 0
    %121 = vmatpush.bf16.msra.mxu0 0
    %122 = vmatpush.bf16.msra.mxu0 0
    %123 = vmatpush.bf16.msra.mxu0 0
    %124 = vmatpush.bf16.msra.mxu0 0
    %125 = vmatpush.bf16.msra.mxu0 0
    %126 = vmatpush.bf16.msra.mxu0 %v113
    %127 = vmatpush.bf16.msra.mxu0 %v112
    %128 = vmatmul.bf16.gmra.mxu0 %v118
    %v129 = vpop.f32.mrf.mxu0
    %v130 = vadd.f32 %v102, %v129
    %v131 = vpop.f32.mrf.mxu0
    %132 = vdwg.mxu0
    %v133 = vmul.f32 %v130, 0.5
    %v134 = vmul.f32 %v133, 1.442695
    %v135 = vpow.pop %v134
    %v136 = vld [vmem:[%s1] sm:$0xff]
    %v137 = vmul.f32 %v136, %v135
    %v138 = vadd.f32 %v137, %v130
    %v139 = vpack.c.bf16 %v138, %v138
    %v140 = vld [vmem:[%s6] sm:$0xf]
    %v141 = vld [vmem:[%s6 + $0x4] sm:$0xf]
    %v142 = vld [vmem:[%s7] sm:$0x1]
    %v144 = vperm.slane %v142, 0
    %v148 = vunpack.c.l.b16 %v140
    %v149 = vunpack.c.l.b16 %v141
    %v150 = vpack.c.b16 %v149, %v148
    %vm152 = vcmask 130048
    %v154 = vsel %vm152, %v139, 0
    %156 = vmatpush.bf16.msra.mxu0 0
    %157 = vmatpush.bf16.msra.mxu0 0
    %158 = vmatpush.bf16.msra.mxu0 0
    %159 = vmatpush.bf16.msra.mxu0 0
    %160 = vmatpush.bf16.msra.mxu0 0
    %161 = vmatpush.bf16.msra.mxu0 0
    %162 = vmatpush.bf16.msra.mxu0 0
    %163 = vmatpush.bf16.msra.mxu0 %v150
    %164 = vmatmul.bf16.gmra.mxu0 %v154
    %v165 = vpop.f32.mrf.mxu0
    %v166 = vadd.f32 %v144, %v165
    %v167 = vpop.f32.mrf.mxu0
    %168 = vdwg.mxu0
    %vm169 = vcmp.ge.f32.partialorder %v166, 0.0
    %v170 = vmul.f32 %v166, 0.01
    %v171 = vsel %vm169, %v166, %v170
    %v172 = vpack.c.bf16 %v171, %v171
    %v173 = vld [vmem:[%s8] sm:$0xf]
    %v174 = vld [vmem:[%s8 + $0x4] sm:$0xf]
    %v175 = vld [vmem:[%s8 + $0x8] sm:$0xf]
    %v176 = vld [vmem:[%s8 + $0xc] sm:$0xf]
    %v177 = vld [vmem:[%s9] sm:$0x1]
    %v179 = vperm.slane %v177, 0
    %v185 = vunpack.c.l.b16 %v173
    %v186 = vunpack.c.l.b16 %v174
    %v187 = vunpack.c.l.b16 %v175
    %v188 = vunpack.c.l.b16 %v176
    %v189 = vpack.c.b16 %v186, %v185
    %v190 = vpack.c.b16 %v188, %v187
    %v194 = vsel %vm116, %v172, 0
    %196 = vmatpush.bf16.msra.mxu0 0
    %197 = vmatpush.bf16.msra.mxu0 0
    %198 = vmatpush.bf16.msra.mxu0 0
    %199 = vmatpush.bf16.msra.mxu0 0
    %200 = vmatpush.bf16.msra.mxu0 0
    %201 = vmatpush.bf16.msra.mxu0 0
    %202 = vmatpush.bf16.msra.mxu0 %v190
    %203 = vmatpush.bf16.msra.mxu0 %v189
    %204 = vmatmul.bf16.gmra.mxu0 %v194
    %v205 = vpop.f32.mrf.mxu0
    %v206 = vadd.f32 %v179, %v205
    %v207 = vpop.f32.mrf.mxu0
    %208 = vdwg.mxu0
    %v209 = vxor.u32 %v206, 2147483648
    %v210 = vmul.f32 %v209, 1.442695
    %v211 = vpow.pop %v210
    %v212 = vadd.f32 %v211, 1.0
    %v213 = vrcp.pop %v212
    %v214 = vmul.f32 %v212, %v213
    %v215 = vsub.f32 1.0, %v214
    %v216 = vmul.f32 %v213, %v215
    %v217 = vadd.f32 %v213, %v216
    %vm218 = vweird.f32 %v212
    %vm219 = vweird.f32 %v213
    %vm220 = vmor %vm218, %vm219
    %v221 = vsel %vm220, %v213, %v217
    %v222 = vand.u32 2147483647, %v212
    %vm223 = vcmp.eq.f32.partialorder %v222, 8.507059e+37
    %v224 = vand.u32 %v212, 2147483648
    %v225 = vor.u32 1.1754944e-38, %v224
    %v226 = vsel %vm223, %v225, %v221
    %v227 = vmul.f32 1.0, %v226
    %228 = vst.msk [vmem:[#allocation2] sm:$0xff] %vm152, %v130
    %230 = vrot.lane.b32.xlu0 %v138, 16
    %v231 = vpop.permute.xlu0 %230
    %vm233 = vcmask 261248
    %234 = vst.msk [vmem:[#allocation2] sm:$0xff] %vm233, %v231
    %236 = vrot.lane.b32.xlu0 %v227, 32
    %v237 = vpop.permute.xlu0 %236
    %vm239 = vcmask 785664
    %240 = vst.msk [vmem:[#allocation2] sm:$0xff] %vm239, %v237
    // Predicated region
    $region42: #{tpu_custom_call.1} parent=1 // pred_check
      _
    $region43: #{tpu_custom_call.1} parent=1 // pred_check_branch
      %242 = sbr.rel (0) target = $region45
    $region44: #{tpu_custom_call.1} parent=1 // pred_region
      %244 = vsyncadd [#allocation3], 0
      %s246 = sshll.u32 [#allocation2], 4
      %s247 = int_to_ptr.vmem [resolvable:$true] %s246
      %s248 = sshll.u32 %s10, 4
      %s249 = int_to_ptr.hbm [resolvable:$true] %s248
      %251 = dma.vmem_to_hbm [thread:$0]  %s247, 128, %s249, [#allocation3]
    $region45: #{tpu_custom_call.1} parent=1 // pred_fallthru
      _
    // Predicated region
    $region46: #{tpu_custom_call.1} parent=1 // pred_check
      _
    $region47: #{tpu_custom_call.1} parent=1 // pred_check_branch
      %253 = sbr.rel (0) target = $region49
    $region48: #{tpu_custom_call.1} parent=1 // pred_region
      %255 = dma.done [#allocation3], 128
    $region49: #{tpu_custom_call.1} parent=1 // pred_fallthru
      _
    %256 = vsyncpa [#allocation3], 1

</llo_original>
